<compile_context>
chip_gen: v6e
topology: v6e:2x2x1
jax: 0.10.0
libtpu: 0.0.40
codegen_flags: <defaults>
</compile_context>

<pallas_src>
import functools

import jax
import jax.numpy as jnp
import numpy as np
from jax.experimental import pallas as pl
from jax.experimental.pallas import tpu as pltpu


def _round_up(x, m):
    return (x + m - 1) // m * m


# ----------------------------- kernels ------------------------------------ #

def _fwd_kernel(z_ref, w0_ref, b0_ref, w1_ref, b1_ref, wmu_ref, bmu_ref,
                mu_ref, h1_scr, *, apply_sigmoid, compute_dtype):
    """Forward only.  Trunk (z->h0->h1) computed once per batch tile (xi==0)."""
    xi = pl.program_id(1)

    @pl.when(xi == 0)
    def _trunk():
        h0 = jnp.maximum(
            jnp.dot(z_ref[...], w0_ref[...], preferred_element_type=jnp.float32)
            + b0_ref[...], 0.0)
        h1 = jnp.maximum(
            jnp.dot(h0.astype(compute_dtype), w1_ref[...],
                    preferred_element_type=jnp.float32) + b1_ref[...], 0.0)
        h1_scr[...] = h1.astype(compute_dtype)

    mu = jnp.dot(h1_scr[...], wmu_ref[...],
                 preferred_element_type=jnp.float32) + bmu_ref[...]
    if apply_sigmoid:
        mu = jax.nn.sigmoid(mu)
    mu_ref[...] = mu.astype(mu_ref.dtype)


def _fwd_jac_kernel(z_ref, w0_ref, b0_ref, w1_ref, b1_ref, wmu_ref, bmu_ref,
                    mu_ref, jact_ref, h1_scr, jmid_scr,
                    *, apply_sigmoid, compute_dtype, tile_b, z_pad):
    """Forward + per-sample Jacobian of the pre-sigmoid linear chain.

    J_b = Wmu diag(m1_b) W1 diag(m0_b) W0, computed in transposed (lane-dense)
    form with batched slab matmuls.  Output is stored as J^T tiles
    (tile_b, z_pad, tile_x) so every store is a full-lane store; the wrapper
    transposes once to the torch (B, out_dim, z_dim) layout.
    """
    xi = pl.program_id(1)

    @pl.when(xi == 0)
    def _trunk():
        h0 = jnp.maximum(
            jnp.dot(z_ref[...], w0_ref[...], preferred_element_type=jnp.float32)
            + b0_ref[...], 0.0)                                   # (TB, Hp) f32
        h1 = jnp.maximum(
            jnp.dot(h0.astype(compute_dtype), w1_ref[...],
                    preferred_element_type=jnp.float32) + b1_ref[...], 0.0)
        h1_scr[...] = h1.astype(compute_dtype)

        mask0 = (h0 > 0.0).astype(compute_dtype)                  # (TB, Hp)
        mask1 = (h1 > 0.0).astype(jnp.float32)                    # (TB, Hp)

        # slab[b*Zp + z, h] = mask0[b, h] * W0^T[z, h] (kept in compute dtype;
        # masks are exact in bf16) -> one (TB*Zp, Hp) @ (Hp, Hp) MXU matmul.
        slab = (mask0[:, None, :] * w0_ref[...][None, :, :]
                ).reshape(tile_b * z_pad, -1)
        mid = jnp.dot(slab, w1_ref[...],
                      preferred_element_type=jnp.float32)         # (TB*Zp, Hp)
        mid = mid.reshape(tile_b, z_pad, -1) * mask1[:, None, :]
        jmid_scr[...] = mid.reshape(tile_b * z_pad, -1).astype(compute_dtype)

    wmut = wmu_ref[...]                                           # (Hp, TX)
    mu = jnp.dot(h1_scr[...], wmut,
                 preferred_element_type=jnp.float32) + bmu_ref[...]
    if apply_sigmoid:
        mu = jax.nn.sigmoid(mu)
    mu_ref[...] = mu.astype(mu_ref.dtype)

    # Batched lane-dense J^T tile: one (TB*Zp, Hp) @ (Hp, TX) matmul, stored
    # directly in its natural layout (last dim = tile_x, multiple of 128).
    jt = jnp.dot(jmid_scr[...], wmut, preferred_element_type=jnp.float32)
    jact_ref[...] = jt.reshape(tile_b, z_pad, -1).astype(jact_ref.dtype)


# ----------------------------- wrapper ------------------------------------ #

def init_params(key, z_dim, h_dim, x_dim, output_dist):
    """Deterministic PyTorch-Linear-style init (U(-1/sqrt(fan_in), 1/sqrt(fan_in)))."""
    out_dim = x_dim[1] * x_dim[2] * x_dim[0]
    ks = jax.random.split(key, 6)

    def linear(kw, kb, fan_in, fan_out):
        bound = 1.0 / np.sqrt(fan_in)
        w = jax.random.uniform(kw, (fan_out, fan_in), jnp.float32, -bound, bound)
        b = jax.random.uniform(kb, (fan_out,), jnp.float32, -bound, bound)
        return w, b

    w0, b0 = linear(ks[0], ks[1], z_dim, h_dim)
    w1, b1 = linear(ks[2], ks[3], h_dim, h_dim)
    wmu, bmu = linear(ks[4], ks[5], h_dim, out_dim)
    params = dict(w0=w0, b0=b0, w1=w1, b1=b1, wmu=wmu, bmu=bmu)
    if output_dist == 'gaussian':
        params['logvar'] = jnp.zeros((1,), jnp.float32)
    return params


def _vmem_budget_bytes():
    """Generation-aware VMEM budget (~0.8 * capacity, capped)."""
    try:
        info = pltpu.get_tpu_info()
        cap = int(getattr(info, "vmem_capacity_bytes", 64 * 1024 * 1024))
    except Exception:
        cap = 64 * 1024 * 1024           # conservative fallback (v7x-sized)
    return min(int(cap * 0.8), 112 * 1024 * 1024), cap


def base_decoder_forward(z, params, output_dist, compute_jacobian=False,
                         compute_dtype=jnp.bfloat16, jact_dtype=None):
    f32 = jnp.float32
    if jact_dtype is None:
        jact_dtype = f32
    B, z_dim = z.shape
    h_dim = params['w0'].shape[0]
    out_dim = params['wmu'].shape[0]

    # ---- padded / tiled geometry (lane-dense: 128-lane multiples) ----
    z_pad = _round_up(z_dim, 8)
    h_pad = _round_up(h_dim, 128)
    tile_x = min(512, _round_up(out_dim, 128))
    n_x = -(-out_dim // tile_x)                     # cdiv
    x_pad = n_x * tile_x

    cb = jnp.dtype(compute_dtype).itemsize
    jb = jnp.dtype(jact_dtype).itemsize
    budget, vmem_cap = _vmem_budget_bytes()
    small_vmem = vmem_cap < 96 * 1024 * 1024        # v7x-like: 2 TCs share grid

    def vmem_est(tb):
        # single-buffered residents + double-buffered blocks + scratch + temps
        resident = (z_pad * h_pad + h_pad * h_pad) * cb + 2 * h_pad * 4
        blocked = 2 * (tb * z_pad * cb + h_pad * tile_x * cb + tile_x * 4
                       + tb * tile_x * 4)
        scratch = tb * h_pad * cb
        temps = 4 * tb * h_pad * 4
        if compute_jacobian:
            blocked += 2 * tb * z_pad * tile_x * jb
            scratch += tb * z_pad * h_pad * cb
            temps += tb * z_pad * (h_pad * (cb + 4) + tile_x * 4)
        return resident + blocked + scratch + temps

    # ---- batch tiling: as large as the VMEM budget allows ----
    if B <= 8:
        tile_b, b_pad = B, B
    else:
        cap_b = _round_up(B, 8)
        tile_b = 8
        for cand in (256, 128, 64, 32, 16, 8):
            if cand <= cap_b and vmem_est(cand) <= budget:
                tile_b = cand
                break
        b_pad = _round_up(B, tile_b)
        # On 2-TC (v7x-like) parts keep >= 2 batch tiles so the "parallel"
        # axis feeds both cores.
        if small_vmem and b_pad // tile_b < 2 and tile_b >= 16:
            tile_b //= 2
            b_pad = _round_up(B, tile_b)
    n_b = b_pad // tile_b

    # ---- pack weights: transpose, zero-pad, cast (glue; do once in real use) ----
    def pad2(a, r, c):
        return jnp.pad(a, ((0, r - a.shape[0]), (0, c - a.shape[1])))

    w0t = pad2(params['w0'].T, z_pad, h_pad).astype(compute_dtype)    # (Zp, Hp)
    w1t = pad2(params['w1'].T, h_pad, h_pad).astype(compute_dtype)    # (Hp, Hp)
    wmut = pad2(params['wmu'].T, h_pad, x_pad).astype(compute_dtype)  # (Hp, Xp)
    b0 = jnp.pad(params['b0'], (0, h_pad - h_dim)).reshape(1, -1).astype(f32)
    b1 = jnp.pad(params['b1'], (0, h_pad - h_dim)).reshape(1, -1).astype(f32)
    bmu = jnp.pad(params['bmu'], (0, x_pad - out_dim)).reshape(1, -1).astype(f32)
    zp = jnp.pad(z, ((0, b_pad - B), (0, z_pad - z_dim))).astype(compute_dtype)

    args = (zp, w0t, b0, w1t, b1, wmut, bmu)
    resident = pl.BlockSpec(memory_space=pltpu.MemorySpace.VMEM)  # whole-array,
    in_specs = [                                                  # single copy
        pl.BlockSpec((tile_b, z_pad), lambda bi, xi: (bi, 0)),    # z  (batch tile)
        resident,                                                 # W0^T
        resident,                                                 # b0
        resident,                                                 # W1^T
        resident,                                                 # b1
        pl.BlockSpec((h_pad, tile_x), lambda bi, xi: (0, xi)),    # Wmu^T x-tile
        pl.BlockSpec((1, tile_x), lambda bi, xi: (0, xi)),        # bmu  x-tile
    ]
    apply_sigmoid = (output_dist == 'bernoulli')
    grid = (n_b, n_x)
    compiler_params = pltpu.CompilerParams(
        dimension_semantics=("parallel", "arbitrary"),   # batch tiles across TCs;
        vmem_limit_bytes=int(budget),                    # xi carries scratch state
    )

    if not compute_jacobian:
        mu = pl.pallas_call(
            functools.partial(_fwd_kernel, apply_sigmoid=apply_sigmoid,
                              compute_dtype=compute_dtype),
            grid=grid,
            in_specs=in_specs,
            out_specs=pl.BlockSpec((tile_b, tile_x), lambda bi, xi: (bi, xi)),
            out_shape=jax.ShapeDtypeStruct((b_pad, x_pad), f32),   # padded: full stores
            scratch_shapes=[pltpu.VMEM((tile_b, h_pad), compute_dtype)],
            compiler_params=compiler_params,
        )(*args)
        mu = mu[:B, :out_dim]
        if output_dist == 'gaussian':
            return (mu, params['logvar'])       # DiagonalGaussian(mu, logvar) params
        elif output_dist == 'bernoulli':
            return mu                           # Bernoulli(mu) param
        raise ValueError(output_dist)

    mu, jact = pl.pallas_call(
        functools.partial(_fwd_jac_kernel, apply_sigmoid=apply_sigmoid,
                          compute_dtype=compute_dtype, tile_b=tile_b, z_pad=z_pad),
        grid=grid,
        in_specs=in_specs,
        out_specs=(pl.BlockSpec((tile_b, tile_x), lambda bi, xi: (bi, xi)),
                   pl.BlockSpec((tile_b, z_pad, tile_x), lambda bi, xi: (bi, 0, xi))),
        out_shape=(jax.ShapeDtypeStruct((b_pad, x_pad), f32),
                   jax.ShapeDtypeStruct((b_pad, z_pad, x_pad), jact_dtype)),
        scratch_shapes=[pltpu.VMEM((tile_b, h_pad), compute_dtype),
                        pltpu.VMEM((tile_b * z_pad, h_pad), compute_dtype)],
        compiler_params=compiler_params,
    )(*args)
    mu = mu[:B, :out_dim]
    # jact is J^T: (B, z, x).  One XLA transpose -> torch layout (B, out_dim, z_dim).
    W_out = jnp.transpose(jact[:B, :z_dim, :out_dim], (0, 2, 1))

    if output_dist == 'gaussian':
        return (mu, params['logvar']), W_out
    elif output_dist == 'bernoulli':
        mu_clip = jnp.clip(mu, 1e-5, 1.0 - 1e-5)
        logvar = -jnp.log(mu_clip * (1.0 - mu_clip) + 1e-5)   # torch mutates self.logvar
        return (mu, logvar), W_out
    raise ValueError(output_dist)
# TODO(synk): torch wraps outputs in distribution.DiagonalGaussian / distribution.Bernoulli
#             objects; here we return the distribution parameters directly.


# ----------------------------- reference & main ---------------------------- #

def _reference(z, params, output_dist, compute_jacobian=False,
               compute_dtype=jnp.float32):
    """Pure-jnp reference.  With compute_dtype=bf16 it mirrors the kernel's MXU
    behaviour (bf16 operands, f32 accumulation) so masks/values match tightly."""
    f32 = jnp.float32
    c = lambda x: x.astype(compute_dtype).astype(f32)
    w0t, w1t, wmut = c(params['w0'].T), c(params['w1'].T), c(params['wmu'].T)
    h0 = jax.nn.relu(c(z) @ w0t + params['b0'])
    h1 = jax.nn.relu(c(h0) @ w1t + params['b1'])
    mu = c(h1) @ wmut + params['bmu']
    if output_dist == 'bernoulli':
        mu = jax.nn.sigmoid(mu)
    if not compute_jacobian:
        return mu
    m0 = (h0 > 0).astype(f32)
    m1 = (h1 > 0).astype(f32)
    slab = m0[:, None, :] * w0t[None]                         # (B, Z, H)
    mid = jnp.einsum('bzh,hk->bzk', c(slab), w1t) * m1[:, None, :]
    jt = jnp.einsum('bzh,hx->bzx', c(mid), wmut)              # (B, Z, X) = J^T
    return mu, jnp.transpose(jt, (0, 2, 1))                   # torch layout (B, X, Z)


if __name__ == "__main__":
    key0 = jax.random.PRNGKey(0)

    # ------------------ case 1: tiny shapes, single-tile grid -------------- #
    B, Z_DIM, H_DIM = 2, 8, 32
    X_DIM = (1, 4, 4)                                  # out_dim = 16
    kz, kp = jax.random.split(key0)
    z = jax.random.normal(kz, (B, Z_DIM), jnp.float32)
    params_g = init_params(kp, Z_DIM, H_DIM, X_DIM, 'gaussian')
    params_b = init_params(kp, Z_DIM, H_DIM, X_DIM, 'bernoulli')

    # f32 compute path: parity with the pure reference
    mu_g, _ = base_decoder_forward(z, params_g, 'gaussian', compute_dtype=jnp.float32)
    jax.block_until_ready(mu_g)
    np.testing.assert_allclose(np.asarray(mu_g),
                               np.asarray(_reference(z, params_g, 'gaussian')),
                               rtol=1e-5, atol=1e-5)

    mu_b = base_decoder_forward(z, params_b, 'bernoulli', compute_dtype=jnp.float32)
    jax.block_until_ready(mu_b)
    np.testing.assert_allclose(np.asarray(mu_b),
                               np.asarray(_reference(z, params_b, 'bernoulli')),
                               rtol=1e-5, atol=1e-5)

    (mu_j, _), W_out = base_decoder_forward(z, params_g, 'gaussian',
                                            compute_jacobian=True,
                                            compute_dtype=jnp.float32)
    jax.block_until_ready(W_out)
    mu_ref, W_ref = _reference(z, params_g, 'gaussian', compute_jacobian=True)
    np.testing.assert_allclose(np.asarray(mu_j), np.asarray(mu_ref), rtol=1e-5, atol=1e-5)
    np.testing.assert_allclose(np.asarray(W_out), np.asarray(W_ref), rtol=1e-5, atol=1e-5)

    # bf16 compute path (MXU-native), checked vs a bf16-operand reference
    (mu_jb, _), W_out_b = base_decoder_forward(z, params_g, 'gaussian',
                                               compute_jacobian=True,
                                               compute_dtype=jnp.bfloat16)
    jax.block_until_ready(W_out_b)
    mu_ref_b, W_ref_b = _reference(z, params_g, 'gaussian', compute_jacobian=True,
                                   compute_dtype=jnp.bfloat16)
    np.testing.assert_allclose(np.asarray(mu_jb), np.asarray(mu_ref_b), rtol=2e-3, atol=2e-3)
    np.testing.assert_allclose(np.asarray(W_out_b), np.asarray(W_ref_b), rtol=2e-3, atol=2e-3)

    # ------------- case 2: multi-tile grid (batch + x tiling, padding) ----- #
    B2, Z2, H2 = 20, 6, 48
    X2 = (3, 16, 16)                                   # out_dim = 768 -> 2 x-tiles
    k2 = jax.random.fold_in(key0, 1)
    kz2, kp2 = jax.random.split(k2)
    z2 = jax.random.normal(kz2, (B2, Z2), jnp.float32)
    params2_g = init_params(kp2, Z2, H2, X2, 'gaussian')
    params2_b = init_params(kp2, Z2, H2, X2, 'bernoulli')

    (mu2, _), W2 = base_decoder_forward(z2, params2_g, 'gaussian',
                                        compute_jacobian=True,
                                        compute_dtype=jnp.float32)
    jax.block_until_ready(W2)
    mu2_ref, W2_ref = _reference(z2, params2_g, 'gaussian', compute_jacobian=True)
    np.testing.assert_allclose(np.asarray(mu2), np.asarray(mu2_ref), rtol=1e-5, atol=1e-5)
    np.testing.assert_allclose(np.asarray(W2), np.asarray(W2_ref), rtol=1e-5, atol=1e-5)

    mu2_b = base_decoder_forward(z2, params2_b, 'bernoulli', compute_dtype=jnp.bfloat16)
    jax.block_until_ready(mu2_b)
    np.testing.assert_allclose(
        np.asarray(mu2_b),
        np.asarray(_reference(z2, params2_b, 'bernoulli', compute_dtype=jnp.bfloat16)),
        rtol=2e-3, atol=2e-3)

    # bf16 compute + bf16 Jacobian writeback (halved HBM traffic) — loose tol.
    (mu2_jb, _), W2_b = base_decoder_forward(z2, params2_g, 'gaussian',
                                             compute_jacobian=True,
                                             compute_dtype=jnp.bfloat16,
                                             jact_dtype=jnp.bfloat16)
    jax.block_until_ready(W2_b)
    mu2_refb, W2_refb = _reference(z2, params2_g, 'gaussian', compute_jacobian=True,
                                   compute_dtype=jnp.bfloat16)
    np.testing.assert_allclose(np.asarray(mu2_jb), np.asarray(mu2_refb), rtol=2e-3, atol=2e-3)
    np.testing.assert_allclose(np.asarray(W2_b, dtype=np.float32), np.asarray(W2_refb),
                               rtol=1e-2, atol=1e-2)

    print("KERNEL_OK")
</pallas_src>

<mosaic_0001>
module attributes {stable_mosaic.version = 11 : i64} {
  func.func @_fwd_kernel(%arg0: i32, %arg1: i32, %arg2: memref<2x8xf32, #tpu.memory_space<vmem>>, %arg3: memref<8x128xf32, #tpu.memory_space<vmem>>, %arg4: memref<1x128xf32, #tpu.memory_space<vmem>>, %arg5: memref<128x128xf32, #tpu.memory_space<vmem>>, %arg6: memref<1x128xf32, #tpu.memory_space<vmem>>, %arg7: memref<128x128xf32, #tpu.memory_space<vmem>>, %arg8: memref<1x128xf32, #tpu.memory_space<vmem>>, %arg9: memref<2x128xf32, #tpu.memory_space<vmem>>, %arg10: memref<2x128xf32, #tpu.memory_space<vmem>>) attributes {dimension_semantics = [#tpu.dimension_semantics<parallel>, #tpu.dimension_semantics<arbitrary>], iteration_bounds = array<i64: 1, 1>, scalar_prefetch = 0 : i64, scratch_operands = 1 : i64, tpu.core_type = #tpu.core_type<tc>, window_params = [{transform_indices = @transform_0, window_bounds = array<i64: 2, 8>}, {pipeline_mode = #tpu.pipeline_mode<synchronous>, transform_indices = @transform_1, window_bounds = array<i64: 8, 128>}, {pipeline_mode = #tpu.pipeline_mode<synchronous>, transform_indices = @transform_2, window_bounds = array<i64: 1, 128>}, {pipeline_mode = #tpu.pipeline_mode<synchronous>, transform_indices = @transform_3, window_bounds = array<i64: 128, 128>}, {pipeline_mode = #tpu.pipeline_mode<synchronous>, transform_indices = @transform_4, window_bounds = array<i64: 1, 128>}, {transform_indices = @transform_5, window_bounds = array<i64: 128, 128>}, {transform_indices = @transform_6, window_bounds = array<i64: 1, 128>}, {transform_indices = @transform_7, window_bounds = array<i64: 2, 128>}]} {
    %c0_i32 = arith.constant 0 : i32
    %0 = arith.cmpi eq, %arg1, %c0_i32 : i32
    %1 = arith.extui %0 : i1 to i32
    %c0_i32_0 = arith.constant 0 : i32
    %2 = arith.cmpi ne, %1, %c0_i32_0 : i32
    scf.if %2 {
      %c0_8 = arith.constant 0 : index
      %c0_9 = arith.constant 0 : index
      %10 = vector.load %arg2[%c0_8, %c0_9] : memref<2x8xf32, #tpu.memory_space<vmem>>, vector<2x8xf32>
      %c0_10 = arith.constant 0 : index
      %c0_11 = arith.constant 0 : index
      %11 = vector.load %arg3[%c0_10, %c0_11] : memref<8x128xf32, #tpu.memory_space<vmem>>, vector<8x128xf32>
      %cst_12 = arith.constant dense<0.000000e+00> : vector<2x128xf32>
      %12 = tpu.matmul %10, %11, %cst_12 {dimension_numbers = #tpu.dot_dimension_numbers<[1], [0], [0], [1], [0, 0, 1, 1], [], []>} : vector<2x8xf32>, vector<8x128xf32>, vector<2x128xf32> -> vector<2x128xf32>
      %c0_13 = arith.constant 0 : index
      %c0_14 = arith.constant 0 : index
      %13 = vector.load %arg4[%c0_13, %c0_14] : memref<1x128xf32, #tpu.memory_space<vmem>>, vector<1x128xf32>
      %14 = vector.broadcast %13 : vector<1x128xf32> to vector<2x128xf32>
      %15 = arith.addf %12, %14 : vector<2x128xf32>
      %cst_15 = arith.constant 0.000000e+00 : f32
      %16 = vector.broadcast %cst_15 : f32 to vector<2x128xf32>
      %17 = arith.maximumf %15, %16 : vector<2x128xf32>
      %c0_16 = arith.constant 0 : index
      %c0_17 = arith.constant 0 : index
      %18 = vector.load %arg5[%c0_16, %c0_17] : memref<128x128xf32, #tpu.memory_space<vmem>>, vector<128x128xf32>
      %cst_18 = arith.constant dense<0.000000e+00> : vector<2x128xf32>
      %19 = tpu.matmul %17, %18, %cst_18 {dimension_numbers = #tpu.dot_dimension_numbers<[1], [0], [0], [1], [0, 0, 1, 1], [], []>} : vector<2x128xf32>, vector<128x128xf32>, vector<2x128xf32> -> vector<2x128xf32>
      %c0_19 = arith.constant 0 : index
      %c0_20 = arith.constant 0 : index
      %20 = vector.load %arg6[%c0_19, %c0_20] : memref<1x128xf32, #tpu.memory_space<vmem>>, vector<1x128xf32>
      %21 = vector.broadcast %20 : vector<1x128xf32> to vector<2x128xf32>
      %22 = arith.addf %19, %21 : vector<2x128xf32>
      %cst_21 = arith.constant 0.000000e+00 : f32
      %23 = vector.broadcast %cst_21 : f32 to vector<2x128xf32>
      %24 = arith.maximumf %22, %23 : vector<2x128xf32>
      %c0_22 = arith.constant 0 : index
      %c0_23 = arith.constant 0 : index
      %25 = vector.load %arg10[%c0_22, %c0_23] : memref<2x128xf32, #tpu.memory_space<vmem>>, vector<2x128xf32>
      tpu.vector_store %arg10[%c0_22, %c0_23], %24 {strides = array<i32>} : memref<2x128xf32, #tpu.memory_space<vmem>>, vector<2x128xf32>,
    } else {
    }
    %c0 = arith.constant 0 : index
    %c0_1 = arith.constant 0 : index
    %3 = vector.load %arg10[%c0, %c0_1] : memref<2x128xf32, #tpu.memory_space<vmem>>, vector<2x128xf32>
    %c0_2 = arith.constant 0 : index
    %c0_3 = arith.constant 0 : index
    %4 = vector.load %arg7[%c0_2, %c0_3] : memref<128x128xf32, #tpu.memory_space<vmem>>, vector<128x128xf32>
    %cst = arith.constant dense<0.000000e+00> : vector<2x128xf32>
    %5 = tpu.matmul %3, %4, %cst {dimension_numbers = #tpu.dot_dimension_numbers<[1], [0], [0], [1], [0, 0, 1, 1], [], []>} : vector<2x128xf32>, vector<128x128xf32>, vector<2x128xf32> -> vector<2x128xf32>
    %c0_4 = arith.constant 0 : index
    %c0_5 = arith.constant 0 : index
    %6 = vector.load %arg8[%c0_4, %c0_5] : memref<1x128xf32, #tpu.memory_space<vmem>>, vector<1x128xf32>
    %7 = vector.broadcast %6 : vector<1x128xf32> to vector<2x128xf32>
    %8 = arith.addf %5, %7 : vector<2x128xf32>
    %c0_6 = arith.constant 0 : index
    %c0_7 = arith.constant 0 : index
    %9 = vector.load %arg9[%c0_6, %c0_7] : memref<2x128xf32, #tpu.memory_space<vmem>>, vector<2x128xf32>
    tpu.vector_store %arg9[%c0_6, %c0_7], %8 {strides = array<i32>} : memref<2x128xf32, #tpu.memory_space<vmem>>, vector<2x128xf32>,
    return
  }
  func.func @transform_0(%arg0: i32, %arg1: i32) -> (i32, i32) {
    %c0_i32 = arith.constant 0 : i32
    %c0_i32_0 = arith.constant 0 : i32
    return %arg0, %c0_i32 : i32, i32
  }
  func.func @transform_1(%arg0: i32, %arg1: i32) -> (i32, i32) {
    %c0_i32 = arith.constant 0 : i32
    %c0_i32_0 = arith.constant 0 : i32
    %c0_i32_1 = arith.constant 0 : i32
    return %c0_i32, %c0_i32_0 : i32, i32
  }
  func.func @transform_2(%arg0: i32, %arg1: i32) -> (i32, i32) {
    %c0_i32 = arith.constant 0 : i32
    %c0_i32_0 = arith.constant 0 : i32
    %c0_i32_1 = arith.constant 0 : i32
    return %c0_i32, %c0_i32_0 : i32, i32
  }
  func.func @transform_3(%arg0: i32, %arg1: i32) -> (i32, i32) {
    %c0_i32 = arith.constant 0 : i32
    %c0_i32_0 = arith.constant 0 : i32
    %c0_i32_1 = arith.constant 0 : i32
    return %c0_i32, %c0_i32_0 : i32, i32
  }
  func.func @transform_4(%arg0: i32, %arg1: i32) -> (i32, i32) {
    %c0_i32 = arith.constant 0 : i32
    %c0_i32_0 = arith.constant 0 : i32
    %c0_i32_1 = arith.constant 0 : i32
    return %c0_i32, %c0_i32_0 : i32, i32
  }
  func.func @transform_5(%arg0: i32, %arg1: i32) -> (i32, i32) {
    %c0_i32 = arith.constant 0 : i32
    %c0_i32_0 = arith.constant 0 : i32
    return %c0_i32, %arg1 : i32, i32
  }
  func.func @transform_6(%arg0: i32, %arg1: i32) -> (i32, i32) {
    %c0_i32 = arith.constant 0 : i32
    %c0_i32_0 = arith.constant 0 : i32
    return %c0_i32, %arg1 : i32, i32
  }
  func.func @transform_7(%arg0: i32, %arg1: i32) -> (i32, i32) {
    %c0_i32 = arith.constant 0 : i32
    return %arg0, %arg1 : i32, i32
  }
}

</mosaic_0001>

<llo_original>
// kernel: tpu_custom_call.1
$region0: #{tpu_custom_call.1}
  #allocation0 [shape = 'u32[]', space=smem, size = 0x4, offset = 0x4, fixed_abs, tag = 'smem constant byte address 0x4 - core index']
  #allocation1 [shape = 'u32[144,128]{1,0:T(1,128)}', space=vmem, size = 0x12000, scoped, tag = 'internal scratch']
  #allocation2 [shape = 'f32[2,128]{1,0:T(2,128)}', space=vmem, size = 0x400, scoped, tag = 'scratch operand']
  %s0 = inlined_call_operand.hbm [shape: f32[2,8], index: 0, kind: input, shape index: {}]
  %s1 = inlined_call_operand.hbm [shape: f32[8,128], index: 1, kind: input, shape index: {}]
  %s2 = inlined_call_operand.vmem [shape: f32[1,128], index: 2, kind: input, shape index: {}]
  %s3 = inlined_call_operand.hbm [shape: f32[128,128], index: 3, kind: input, shape index: {}]
  %s4 = inlined_call_operand.vmem [shape: f32[1,128], index: 4, kind: input, shape index: {}]
  %s5 = inlined_call_operand.hbm [shape: f32[128,128], index: 5, kind: input, shape index: {}]
  %s6 = inlined_call_operand.vmem [shape: f32[1,128], index: 6, kind: input, shape index: {}]
  %s7 = inlined_call_operand.hbm [shape: f32[2,128], index: 7, kind: output, shape index: {}]
  %s8 = sld [smem:[#allocation0]]
  $region58: #{tpu_custom_call.1} parent=0
    _
  %s10 = ssub.s32 1, %s8
  %s11 = scalar_select 0, %s10, %s8
  $region1: #{tpu_custom_call.1} parent=0
    #allocation3 [shape = 'u8[1024]{0}', space=vmem, size = 0x400, scoped, tag = 'input window, operand 0, single buffered']
    #allocation4 [shape = 's32[1]{0}', space=sflag, size = 0x4, scoped, tag = 'scoped memory for tpu_custom_call.1']
    #allocation5 [shape = 's32[1]{0}', space=sflag, size = 0x4, scoped, tag = 'scoped memory for tpu_custom_call.1']
    #allocation6 [shape = 'u8[4096]{0}', space=vmem, size = 0x1000, scoped, tag = 'input window, operand 1, single buffered']
    #allocation7 [shape = 's32[1]{0}', space=sflag, size = 0x4, scoped, tag = 'scoped memory for tpu_custom_call.1']
    #allocation8 [shape = 'u8[65536]{0}', space=vmem, size = 0x10000, scoped, tag = 'input window, operand 3, single buffered']
    #allocation9 [shape = 'u8[65536]{0}', space=vmem, size = 0x10000, scoped, tag = 'input window, operand 5, single buffered']
    #allocation10 [shape = 's32[1]{0}', space=sflag, size = 0x4, scoped, tag = 'scoped memory for tpu_custom_call.1']
    #allocation11 [shape = 'u8[1024]{0}', space=vmem, size = 0x400, scoped, tag = 'output window, operand 0, single buffered']
    %12 = vsyncpa [#allocation4], 0
    %13 = vsyncpa [#allocation7], 0
    %14 = vsyncpa [#allocation10], 0
    %15 = vsyncpa [#allocation5], 0
    // Predicated region
    $region2: #{tpu_custom_call.1} parent=1 // pred_check
      _
    $region3: #{tpu_custom_call.1} parent=1 // pred_check_branch
      %17 = sbr.rel (0) target = $region5
    $region4: #{tpu_custom_call.1} parent=1 // pred_region
      %s19 = ssub.s32 32, 32
      %20 = vsyncadd [#allocation4], %s19
      %s22 = sshll.u32 [#allocation3], 4
      %s23 = int_to_ptr.vmem [resolvable:$true] %s22
      %25 = dma.hbm_to_vmem [thread:$0]  %s0, 32, %s23, [#allocation4]
    $region5: #{tpu_custom_call.1} parent=1 // pred_fallthru
      _
    // Predicated region
    $region6: #{tpu_custom_call.1} parent=1 // pred_check
      _
    $region7: #{tpu_custom_call.1} parent=1 // pred_check_branch
      %27 = sbr.rel (0) target = $region9
    $region8: #{tpu_custom_call.1} parent=1 // pred_region
      %s29 = ssub.s32 128, 128
      %30 = vsyncadd [#allocation7], %s29
      %s32 = sshll.u32 [#allocation6], 4
      %s33 = int_to_ptr.vmem [resolvable:$true] %s32
      %35 = dma.hbm_to_vmem [thread:$0]  %s1, 128, %s33, [#allocation7]
    $region9: #{tpu_custom_call.1} parent=1 // pred_fallthru
      _
    // Predicated region
    $region10: #{tpu_custom_call.1} parent=1 // pred_check
      _
    $region11: #{tpu_custom_call.1} parent=1 // pred_check_branch
      %37 = sbr.rel (0) target = $region13
    $region12: #{tpu_custom_call.1} parent=1 // pred_region
      _
    $region13: #{tpu_custom_call.1} parent=1 // pred_fallthru
      _
    // Predicated region
    $region14: #{tpu_custom_call.1} parent=1 // pred_check
      _
    $region15: #{tpu_custom_call.1} parent=1 // pred_check_branch
      %39 = sbr.rel (0) target = $region17
    $region16: #{tpu_custom_call.1} parent=1 // pred_region
      %s41 = ssub.s32 2048, 2048
      %42 = vsyncadd [#allocation7], %s41
      %s43 = sshll.u32 [#allocation8], 4
      %s44 = int_to_ptr.vmem [resolvable:$true] %s43
      %49 = dma.hbm_to_vmem [thread:$0]  %s3, 2048, %s44, [#allocation7], 128, 128, 8
    $region17: #{tpu_custom_call.1} parent=1 // pred_fallthru
      _
    // Predicated region
    $region18: #{tpu_custom_call.1} parent=1 // pred_check
      _
    $region19: #{tpu_custom_call.1} parent=1 // pred_check_branch
      %51 = sbr.rel (0) target = $region21
    $region20: #{tpu_custom_call.1} parent=1 // pred_region
      _
    $region21: #{tpu_custom_call.1} parent=1 // pred_fallthru
      _
    // Predicated region
    $region22: #{tpu_custom_call.1} parent=1 // pred_check
      _
    $region23: #{tpu_custom_call.1} parent=1 // pred_check_branch
      %53 = sbr.rel (0) target = $region25
    $region24: #{tpu_custom_call.1} parent=1 // pred_region
      %s55 = ssub.s32 2048, 2048
      %56 = vsyncadd [#allocation10], %s55
      %s57 = sshll.u32 [#allocation9], 4
      %s58 = int_to_ptr.vmem [resolvable:$true] %s57
      %63 = dma.hbm_to_vmem [thread:$0]  %s5, 2048, %s58, [#allocation10], 128, 128, 8
    $region25: #{tpu_custom_call.1} parent=1 // pred_fallthru
      _
    // Predicated region
    $region26: #{tpu_custom_call.1} parent=1 // pred_check
      _
    $region27: #{tpu_custom_call.1} parent=1 // pred_check_branch
      %65 = sbr.rel (0) target = $region29
    $region28: #{tpu_custom_call.1} parent=1 // pred_region
      _
    $region29: #{tpu_custom_call.1} parent=1 // pred_fallthru
      _
    // Predicated region
    $region30: #{tpu_custom_call.1} parent=1 // pred_check
      _
    $region31: #{tpu_custom_call.1} parent=1 // pred_check_branch
      %67 = sbr.rel (0) target = $region33
    $region32: #{tpu_custom_call.1} parent=1 // pred_region
      %68 = dma.done [#allocation4], 32
    $region33: #{tpu_custom_call.1} parent=1 // pred_fallthru
      _
    // Predicated region
    $region34: #{tpu_custom_call.1} parent=1 // pred_check
      _
    $region35: #{tpu_custom_call.1} parent=1 // pred_check_branch
      %70 = sbr.rel (0) target = $region37
    $region36: #{tpu_custom_call.1} parent=1 // pred_region
      %71 = dma.done [#allocation7], 128
    $region37: #{tpu_custom_call.1} parent=1 // pred_fallthru
      _
    // Predicated region
    $region38: #{tpu_custom_call.1} parent=1 // pred_check
      _
    $region39: #{tpu_custom_call.1} parent=1 // pred_check_branch
      %73 = sbr.rel (0) target = $region41
    $region40: #{tpu_custom_call.1} parent=1 // pred_region
      %74 = dma.done [#allocation7], 2048
    $region41: #{tpu_custom_call.1} parent=1 // pred_fallthru
      _
    // Predicated region
    $region42: #{tpu_custom_call.1} parent=1 // pred_check
      _
    $region43: #{tpu_custom_call.1} parent=1 // pred_check_branch
      %76 = sbr.rel (0) target = $region45
    $region44: #{tpu_custom_call.1} parent=1 // pred_region
      %77 = dma.done [#allocation10], 2048
    $region45: #{tpu_custom_call.1} parent=1 // pred_fallthru
      _
    %p78 = scmp.eq.s32.totalorder 0, 0
    // Predicated region
    $region46: #{tpu_custom_call.1} parent=1 // pred_check
      %p79 = pneg %p78
    $region47: #{tpu_custom_call.1} parent=1 // pred_check_branch
      %81 = sbr.rel (%p79) target = $region49
    $region48: #{tpu_custom_call.1} parent=1 // pred_region
      %v82 = vld [vmem:[#allocation3] sm:$0x3]
      %v83 = vld [vmem:[#allocation6] sm:$0xff]
      %v84 = vld [vmem:[%s2] sm:$0x1]
      %v86 = vlaneseq
      %v87 = vshrl.u32 %v86, 7
      %v88 = vsub.s32 0, %v87
      %v89 = vrot.slane %v84, %v88
      %vm91 = vcmask 64512
      %v93 = vsel %vm91, %v82, 0
      %95 = vmatprep.subr.mxu0 0.0
      %96 = vmatpush1.msra.mxu0 0.0
      %97 = vmatprep.subr.mxu0 0.0
      %98 = vmatpush1.msra.mxu0 0.0
      %99 = vmatprep.subr.mxu0 0.0
      %100 = vmatpush1.msra.mxu0 0.0
      %101 = vmatprep.subr.mxu0 0.0
      %102 = vmatpush1.msra.mxu0 0.0
      %103 = vmatprep.subr.mxu0 0.0
      %104 = vmatpush1.msra.mxu0 0.0
      %105 = vmatprep.subr.mxu0 0.0
      %106 = vmatpush1.msra.mxu0 0.0
      %107 = vmatprep.subr.mxu0 0.0
      %108 = vmatpush1.msra.mxu0 0.0
      %109 = vmatprep.subr.mxu0 0.0
      %110 = vmatpush1.msra.mxu0 0.0
      %111 = vmatprep.subr.mxu0 0.0
      %112 = vmatpush1.msra.mxu0 0.0
      %113 = vmatprep.subr.mxu0 0.0
      %114 = vmatpush1.msra.mxu0 0.0
      %115 = vmatprep.subr.mxu0 0.0
      %116 = vmatpush1.msra.mxu0 0.0
      %117 = vmatprep.subr.mxu0 0.0
      %118 = vmatpush1.msra.mxu0 0.0
      %119 = vmatprep.subr.mxu0 0.0
      %120 = vmatpush1.msra.mxu0 0.0
      %121 = vmatprep.subr.mxu0 0.0
      %122 = vmatpush1.msra.mxu0 0.0
      %123 = vmatprep.subr.mxu0 0.0
      %124 = vmatpush1.msra.mxu0 0.0
      %125 = vmatprep.subr.mxu0 0.0
      %126 = vmatpush1.msra.mxu0 %v83
      %127 = vmatprep.subr.mxu0 0.0
      %128 = vmatpush2.msra.mxu0 0.0
      %129 = vmatprep.subr.mxu0 0.0
      %130 = vmatpush2.msra.mxu0 0.0
      %131 = vmatprep.subr.mxu0 0.0
      %132 = vmatpush2.msra.mxu0 0.0
      %133 = vmatprep.subr.mxu0 0.0
      %134 = vmatpush2.msra.mxu0 0.0
      %135 = vmatprep.subr.mxu0 0.0
      %136 = vmatpush2.msra.mxu0 0.0
      %137 = vmatprep.subr.mxu0 0.0
      %138 = vmatpush2.msra.mxu0 0.0
      %139 = vmatprep.subr.mxu0 0.0
      %140 = vmatpush2.msra.mxu0 0.0
      %141 = vmatprep.subr.mxu0 0.0
      %142 = vmatpush2.msra.mxu0 0.0
      %143 = vmatprep.subr.mxu0 0.0
      %144 = vmatpush2.msra.mxu0 0.0
      %145 = vmatprep.subr.mxu0 0.0
      %146 = vmatpush2.msra.mxu0 0.0
      %147 = vmatprep.subr.mxu0 0.0
      %148 = vmatpush2.msra.mxu0 0.0
      %149 = vmatprep.subr.mxu0 0.0
      %150 = vmatpush2.msra.mxu0 0.0
      %151 = vmatprep.subr.mxu0 0.0
      %152 = vmatpush2.msra.mxu0 0.0
      %153 = vmatprep.subr.mxu0 0.0
      %154 = vmatpush2.msra.mxu0 0.0
      %155 = vmatprep.subr.mxu0 0.0
      %156 = vmatpush2.msra.mxu0 0.0
      %157 = vmatprep.subr.mxu0 0.0
      %158 = vmatpush2.msra.mxu0 0.0
      %159 = vmatprep.mubr.f32.mxu0 0.0
      %160 = vmatmul.mubr.f32.gmra.mxu0 %v93
      %v161 = vpop.f32.mrf.mxu0
      %v162 = vadd.f32 %v89, %v161
      %v163 = vpop.f32.mrf.mxu0
      %164 = vdwg.mxu0
      %v165 = vmax.f32 %v162, 0.0
      %v166 = vld [vmem:[#allocation8] sm:$0xff]
      %v167 = vld [vmem:[#allocation8 + $0x8] sm:$0xff]
      %v168 = vld [vmem:[#allocation8 + $0x10] sm:$0xff]
      %v169 = vld [vmem:[#allocation8 + $0x18] sm:$0xff]
      %v170 = vld [vmem:[#allocation8 + $0x20] sm:$0xff]
      %v171 = vld [vmem:[#allocation8 + $0x28] sm:$0xff]
      %v172 = vld [vmem:[#allocation8 + $0x30] sm:$0xff]
      %v173 = vld [vmem:[#allocation8 + $0x38] sm:$0xff]
      %v174 = vld [vmem:[#allocation8 + $0x40] sm:$0xff]
      %v175 = vld [vmem:[#allocation8 + $0x48] sm:$0xff]
      %v176 = vld [vmem:[#allocation8 + $0x50] sm:$0xff]
      %v177 = vld [vmem:[#allocation8 + $0x58] sm:$0xff]
      %v178 = vld [vmem:[#allocation8 + $0x60] sm:$0xff]
      %v179 = vld [vmem:[#allocation8 + $0x68] sm:$0xff]
      %v180 = vld [vmem:[#allocation8 + $0x70] sm:$0xff]
      %v181 = vld [vmem:[#allocation8 + $0x78] sm:$0xff]
      %v182 = vld [vmem:[%s4] sm:$0x1]
      %v184 = vlaneseq
      %v185 = vshrl.u32 %v184, 7
      %v186 = vsub.s32 0, %v185
      %v187 = vrot.slane %v182, %v186
      %189 = vmatprep.subr.mxu0 0.0
      %190 = vmatpush1.msra.mxu0 %v181
      %191 = vmatprep.subr.mxu0 0.0
      %192 = vmatpush1.msra.mxu0 %v180
      %193 = vmatprep.subr.mxu0 0.0
      %194 = vmatpush1.msra.mxu0 %v179
      %195 = vmatprep.subr.mxu0 0.0
      %196 = vmatpush1.msra.mxu0 %v178
      %197 = vmatprep.subr.mxu0 0.0
      %198 = vmatpush1.msra.mxu0 %v177
      %199 = vmatprep.subr.mxu0 0.0
      %200 = vmatpush1.msra.mxu0 %v176
      %201 = vmatprep.subr.mxu0 0.0
      %202 = vmatpush1.msra.mxu0 %v175
      %203 = vmatprep.subr.mxu0 0.0
      %204 = vmatpush1.msra.mxu0 %v174
      %205 = vmatprep.subr.mxu0 0.0
      %206 = vmatpush1.msra.mxu0 %v173
      %207 = vmatprep.subr.mxu0 0.0
      %208 = vmatpush1.msra.mxu0 %v172
      %209 = vmatprep.subr.mxu0 0.0
      %210 = vmatpush1.msra.mxu0 %v171
      %211 = vmatprep.subr.mxu0 0.0
      %212 = vmatpush1.msra.mxu0 %v170
      %213 = vmatprep.subr.mxu0 0.0
      %214 = vmatpush1.msra.mxu0 %v169
      %215 = vmatprep.subr.mxu0 0.0
      %216 = vmatpush1.msra.mxu0 %v168
      %217 = vmatprep.subr.mxu0 0.0
      %218 = vmatpush1.msra.mxu0 %v167
      %219 = vmatprep.subr.mxu0 0.0
      %220 = vmatpush1.msra.mxu0 %v166
      %221 = vmatprep.subr.mxu0 0.0
      %222 = vmatpush2.msra.mxu0 0.0
      %223 = vmatprep.subr.mxu0 0.0
      %224 = vmatpush2.msra.mxu0 0.0
      %225 = vmatprep.subr.mxu0 0.0
      %226 = vmatpush2.msra.mxu0 0.0
      %227 = vmatprep.subr.mxu0 0.0
      %228 = vmatpush2.msra.mxu0 0.0
      %229 = vmatprep.subr.mxu0 0.0
      %230 = vmatpush2.msra.mxu0 0.0
      %231 = vmatprep.subr.mxu0 0.0
      %232 = vmatpush2.msra.mxu0 0.0
      %233 = vmatprep.subr.mxu0 0.0
      %234 = vmatpush2.msra.mxu0 0.0
      %235 = vmatprep.subr.mxu0 0.0
      %236 = vmatpush2.msra.mxu0 0.0
      %237 = vmatprep.subr.mxu0 0.0
      %238 = vmatpush2.msra.mxu0 0.0
      %239 = vmatprep.subr.mxu0 0.0
      %240 = vmatpush2.msra.mxu0 0.0
      %241 = vmatprep.subr.mxu0 0.0
      %242 = vmatpush2.msra.mxu0 0.0
      %243 = vmatprep.subr.mxu0 0.0
      %244 = vmatpush2.msra.mxu0 0.0
      %245 = vmatprep.subr.mxu0 0.0
      %246 = vmatpush2.msra.mxu0 0.0
      %247 = vmatprep.subr.mxu0 0.0
      %248 = vmatpush2.msra.mxu0 0.0
      %249 = vmatprep.subr.mxu0 0.0
      %250 = vmatpush2.msra.mxu0 0.0
      %251 = vmatprep.subr.mxu0 0.0
      %252 = vmatpush2.msra.mxu0 0.0
      %253 = vmatprep.mubr.f32.mxu0 0.0
      %254 = vmatmul.mubr.f32.gmra.mxu0 %v165
      %v255 = vpop.f32.mrf.mxu0
      %v256 = vadd.f32 %v187, %v255
      %v257 = vpop.f32.mrf.mxu0
      %258 = vdwg.mxu0
      %v259 = vmax.f32 %v256, 0.0
      %260 = vst [vmem:[#allocation2] sm:$0x3] %v259
    $region49: #{tpu_custom_call.1} parent=1 // pred_fallthru
      _
    %v261 = vld [vmem:[#allocation2] sm:$0x3]
    %v262 = vld [vmem:[#allocation9] sm:$0xff]
    %v263 = vld [vmem:[#allocation9 + $0x8] sm:$0xff]
    %v264 = vld [vmem:[#allocation9 + $0x10] sm:$0xff]
    %v265 = vld [vmem:[#allocation9 + $0x18] sm:$0xff]
    %v266 = vld [vmem:[#allocation9 + $0x20] sm:$0xff]
    %v267 = vld [vmem:[#allocation9 + $0x28] sm:$0xff]
    %v268 = vld [vmem:[#allocation9 + $0x30] sm:$0xff]
    %v269 = vld [vmem:[#allocation9 + $0x38] sm:$0xff]
    %v270 = vld [vmem:[#allocation9 + $0x40] sm:$0xff]
    %v271 = vld [vmem:[#allocation9 + $0x48] sm:$0xff]
    %v272 = vld [vmem:[#allocation9 + $0x50] sm:$0xff]
    %v273 = vld [vmem:[#allocation9 + $0x58] sm:$0xff]
    %v274 = vld [vmem:[#allocation9 + $0x60] sm:$0xff]
    %v275 = vld [vmem:[#allocation9 + $0x68] sm:$0xff]
    %v276 = vld [vmem:[#allocation9 + $0x70] sm:$0xff]
    %v277 = vld [vmem:[#allocation9 + $0x78] sm:$0xff]
    %v278 = vld [vmem:[%s6] sm:$0x1]
    %v280 = vlaneseq
    %v281 = vshrl.u32 %v280, 7
    %v282 = vsub.s32 0, %v281
    %v283 = vrot.slane %v278, %v282
    %285 = vmatprep.subr.mxu0 0.0
    %286 = vmatpush1.msra.mxu0 %v277
    %287 = vmatprep.subr.mxu0 0.0
    %288 = vmatpush1.msra.mxu0 %v276
    %289 = vmatprep.subr.mxu0 0.0
    %290 = vmatpush1.msra.mxu0 %v275
    %291 = vmatprep.subr.mxu0 0.0
    %292 = vmatpush1.msra.mxu0 %v274
    %293 = vmatprep.subr.mxu0 0.0
    %294 = vmatpush1.msra.mxu0 %v273
    %295 = vmatprep.subr.mxu0 0.0
    %296 = vmatpush1.msra.mxu0 %v272
    %297 = vmatprep.subr.mxu0 0.0
    %298 = vmatpush1.msra.mxu0 %v271
    %299 = vmatprep.subr.mxu0 0.0
    %300 = vmatpush1.msra.mxu0 %v270
    %301 = vmatprep.subr.mxu0 0.0
    %302 = vmatpush1.msra.mxu0 %v269
    %303 = vmatprep.subr.mxu0 0.0
    %304 = vmatpush1.msra.mxu0 %v268
    %305 = vmatprep.subr.mxu0 0.0
    %306 = vmatpush1.msra.mxu0 %v267
    %307 = vmatprep.subr.mxu0 0.0
    %308 = vmatpush1.msra.mxu0 %v266
    %309 = vmatprep.subr.mxu0 0.0
    %310 = vmatpush1.msra.mxu0 %v265
    %311 = vmatprep.subr.mxu0 0.0
    %312 = vmatpush1.msra.mxu0 %v264
    %313 = vmatprep.subr.mxu0 0.0
    %314 = vmatpush1.msra.mxu0 %v263
    %315 = vmatprep.subr.mxu0 0.0
    %316 = vmatpush1.msra.mxu0 %v262
    %317 = vmatprep.subr.mxu0 0.0
    %318 = vmatpush2.msra.mxu0 0.0
    %319 = vmatprep.subr.mxu0 0.0
    %320 = vmatpush2.msra.mxu0 0.0
    %321 = vmatprep.subr.mxu0 0.0
    %322 = vmatpush2.msra.mxu0 0.0
    %323 = vmatprep.subr.mxu0 0.0
    %324 = vmatpush2.msra.mxu0 0.0
    %325 = vmatprep.subr.mxu0 0.0
    %326 = vmatpush2.msra.mxu0 0.0
    %327 = vmatprep.subr.mxu0 0.0
    %328 = vmatpush2.msra.mxu0 0.0
    %329 = vmatprep.subr.mxu0 0.0
    %330 = vmatpush2.msra.mxu0 0.0
    %331 = vmatprep.subr.mxu0 0.0
    %332 = vmatpush2.msra.mxu0 0.0
    %333 = vmatprep.subr.mxu0 0.0
    %334 = vmatpush2.msra.mxu0 0.0
    %335 = vmatprep.subr.mxu0 0.0
    %336 = vmatpush2.msra.mxu0 0.0
    %337 = vmatprep.subr.mxu0 0.0
    %338 = vmatpush2.msra.mxu0 0.0
    %339 = vmatprep.subr.mxu0 0.0
    %340 = vmatpush2.msra.mxu0 0.0
    %341 = vmatprep.subr.mxu0 0.0
    %342 = vmatpush2.msra.mxu0 0.0
    %343 = vmatprep.subr.mxu0 0.0
    %344 = vmatpush2.msra.mxu0 0.0
    %345 = vmatprep.subr.mxu0 0.0
    %346 = vmatpush2.msra.mxu0 0.0
    %347 = vmatprep.subr.mxu0 0.0
    %348 = vmatpush2.msra.mxu0 0.0
    %349 = vmatprep.mubr.f32.mxu0 0.0
    %350 = vmatmul.mubr.f32.gmra.mxu0 %v261
    %v351 = vpop.f32.mrf.mxu0
    %v352 = vadd.f32 %v283, %v351
    %v353 = vpop.f32.mrf.mxu0
    %354 = vdwg.mxu0
    %355 = vst [vmem:[#allocation11] sm:$0x3] %v352
    // Predicated region
    $region50: #{tpu_custom_call.1} parent=1 // pred_check
      _
    $region51: #{tpu_custom_call.1} parent=1 // pred_check_branch
      %357 = sbr.rel (0) target = $region53
    $region52: #{tpu_custom_call.1} parent=1 // pred_region
      %s359 = ssub.s32 32, 32
      %360 = vsyncadd [#allocation5], %s359
      %s362 = sshll.u32 [#allocation11], 4
      %s363 = int_to_ptr.vmem [resolvable:$true] %s362
      %365 = dma.vmem_to_hbm [thread:$0]  %s363, 32, %s7, [#allocation5]
    $region53: #{tpu_custom_call.1} parent=1 // pred_fallthru
      _
    // Predicated region
    $region54: #{tpu_custom_call.1} parent=1 // pred_check
      _
    $region55: #{tpu_custom_call.1} parent=1 // pred_check_branch
      %367 = sbr.rel (0) target = $region57
    $region56: #{tpu_custom_call.1} parent=1 // pred_region
      %368 = dma.done [#allocation5], 32
    $region57: #{tpu_custom_call.1} parent=1 // pred_fallthru
      _
    %369 = vsyncpa [#allocation4], 1
    %370 = vsyncpa [#allocation7], 1
    %371 = vsyncpa [#allocation10], 1
    %372 = vsyncpa [#allocation5], 1

</llo_original>
